<compile_context>
chip_gen: v5e
topology: v5e:2x2
jax: 0.10.0
libtpu: 0.0.40
codegen_flags: <defaults>
</compile_context>

<pallas_src>
import functools

import jax
import jax.numpy as jnp
from jax.experimental import pallas as pl
from jax.experimental.pallas import tpu as pltpu


def _mlp_kernel(num_layers, x_ref, *refs):
    """Batch-on-lane MLP body.

    x_ref : [in_dim, tile_n]   (normalization already folded into layer 0)
    refs  = (Wt_0, b_0, Wt_1, b_1, ..., Wt_{L-1}, b_{L-1}, out_ref)
      Wt_i : [out_i, in_i]   (pre-transposed in the wrapper)
      b_i  : [out_i, 1]
    out_ref : [out_dim, tile_n]
    """
    out_ref = refs[-1]
    wb = refs[:-1]

    h = x_ref[...]                                          # [in_dim, tile_n]
    for i in range(num_layers):
        w = wb[2 * i][...]                                  # [out_i, in_i]
        b = wb[2 * i + 1][...]                              # [out_i, 1]
        h = jnp.dot(w, h, preferred_element_type=jnp.float32) + b   # MXU + VPU
        if i != num_layers - 1:
            h = jnp.tanh(h)                                 # EUP

    out_ref[...] = h.astype(out_ref.dtype)


def pinn_forward(x, t, lb, ub, weights, biases, *, tile_n=4096):
    """Pallas implementation of PhysicsInformedNN.forward (== net_u).

    x, t : [N, 1] float32
    lb, ub : [2] float32 (domain lower/upper bounds for (x, t))
    weights[i] : [layers[i], layers[i+1]]   (i.e. nn.Linear.weight.T)
    biases[i]  : [layers[i+1]]
    Returns u : [N, layers[-1]]
    """
    x = x.astype(jnp.float32)
    t = t.astype(jnp.float32)
    lb = lb.astype(jnp.float32)
    ub = ub.astype(jnp.float32)

    N = x.shape[0]
    num_layers = len(weights)
    out_dim = weights[-1].shape[1]

    # ---- Fold the [-1, 1] normalization into layer 0 (one-time, O(2*H)) ----
    # x_norm = 2*(x - lb)/(ub - lb) - 1  ==  x*scale - shift
    scale = 2.0 / (ub - lb)                      # [2]
    shift = 2.0 * lb / (ub - lb) + 1.0           # [2]
    w0 = weights[0].astype(jnp.float32)          # [2, h0]
    b0 = biases[0].astype(jnp.float32)           # [h0]
    w0_folded = scale[:, None] * w0              # [2, h0]
    b0_folded = b0 - shift @ w0                  # [h0]

    # Pre-transpose weights so the kernel does W^T @ h; biases as columns.
    wT = [w0_folded.T] + [w.astype(jnp.float32).T for w in weights[1:]]
    bC = [b0_folded.reshape(-1, 1)] + [
        b.astype(jnp.float32).reshape(-1, 1) for b in biases[1:]
    ]

    # ---- Batch-on-lane input layout: [2, N] ----
    Xt = jnp.concatenate([x, t], axis=1).T       # [2, N]  (glue)
    in_dim = Xt.shape[0]

    # ---- Tile selection: 128-aligned, large, keep >= 2 grid steps (v7x) ----
    half = -(-N // 2)                            # ceil(N/2)
    half_rounded = -(-half // 128) * 128
    tile = max(128, min(int(tile_n), half_rounded))
    n_pad = -(-N // tile) * tile
    if n_pad != N:
        Xt = jnp.pad(Xt, ((0, 0), (0, n_pad - N)))
    grid = (n_pad // tile,)

    # BlockSpecs: weights/biases are replicated full blocks; input and output
    # are tiled along the lane (batch) axis.
    def full(a):
        return pl.BlockSpec(a.shape, lambda i: (0,) * a.ndim)

    in_specs = [pl.BlockSpec((in_dim, tile), lambda i: (0, i))]
    operands = [Xt]
    for w, b in zip(wT, bC):
        in_specs.append(full(w))
        in_specs.append(full(b))
        operands.append(w)
        operands.append(b)

    out_spec = pl.BlockSpec((out_dim, tile), lambda i: (0, i))

    out_t = pl.pallas_call(
        functools.partial(_mlp_kernel, num_layers),
        out_shape=jax.ShapeDtypeStruct((out_dim, n_pad), jnp.float32),
        grid_spec=pltpu.PrefetchScalarGridSpec(
            num_scalar_prefetch=0,
            grid=grid,
            in_specs=in_specs,
            out_specs=out_spec,
        ),
        compiler_params=pltpu.CompilerParams(
            dimension_semantics=("parallel",)),
    )(*operands)

    # Drop the padding and return in the original [N, out_dim] row layout.
    return out_t[:, :N].T


def init_params(layers, key):
    """Xavier-normal weights, zero biases (matches nn.init in __init__)."""
    weights, biases = [], []
    for i in range(len(layers) - 1):
        key, sub = jax.random.split(key)
        fan_in, fan_out = layers[i], layers[i + 1]
        std = jnp.sqrt(2.0 / (fan_in + fan_out))
        w = std * jax.random.normal(sub, (fan_in, fan_out), dtype=jnp.float32)
        b = jnp.zeros((fan_out,), dtype=jnp.float32)
        weights.append(w)
        biases.append(b)
    return weights, biases


def reference_forward(x, t, lb, ub, weights, biases):
    X = jnp.concatenate([x, t], axis=1)
    X = 2.0 * (X - lb.reshape(1, -1)) / (ub.reshape(1, -1) - lb.reshape(1, -1)) - 1.0
    for i, (w, b) in enumerate(zip(weights, biases)):
        X = X @ w + b.reshape(1, -1)
        if i != len(weights) - 1:
            X = jnp.tanh(X)
    return X


if __name__ == "__main__":
    key = jax.random.PRNGKey(0)

    # Small Burgers-style configuration: layers = [2, 32, 32, 32, 1]
    layers = [2, 32, 32, 32, 1]
    lb = jnp.array([-1.0, 0.0], dtype=jnp.float32)   # (x_min, t_min)
    ub = jnp.array([1.0, 1.0], dtype=jnp.float32)    # (x_max, t_max)

    kp, kx, kt = jax.random.split(key, 3)
    weights, biases = init_params(layers, kp)

    # N deliberately NOT a multiple of 128: exercises wrapper-side padding,
    # and the tile cap keeps 2 grid steps (tile=128, padded N=256).
    N = 200
    x = jax.random.uniform(kx, (N, 1), dtype=jnp.float32, minval=-1.0, maxval=1.0)
    t = jax.random.uniform(kt, (N, 1), dtype=jnp.float32, minval=0.0, maxval=1.0)

    u = pinn_forward(x, t, lb, ub, weights, biases)
    u = jax.block_until_ready(u)

    u_ref = reference_forward(x, t, lb, ub, weights, biases)
    assert u.shape == (N, 1)
    assert jnp.allclose(u, u_ref, atol=1e-4, rtol=1e-4), "mismatch vs JAX reference"

    print("KERNEL_OK")
</pallas_src>

<mosaic_0001>
module attributes {stable_mosaic.version = 11 : i64} {
  func.func @_mlp_kernel(%arg0: i32, %arg1: memref<2x128xf32, #tpu.memory_space<vmem>>, %arg2: memref<32x2xf32, #tpu.memory_space<vmem>>, %arg3: memref<32x1xf32, #tpu.memory_space<vmem>>, %arg4: memref<32x32xf32, #tpu.memory_space<vmem>>, %arg5: memref<32x1xf32, #tpu.memory_space<vmem>>, %arg6: memref<32x32xf32, #tpu.memory_space<vmem>>, %arg7: memref<32x1xf32, #tpu.memory_space<vmem>>, %arg8: memref<1x32xf32, #tpu.memory_space<vmem>>, %arg9: memref<1x1xf32, #tpu.memory_space<vmem>>, %arg10: memref<1x128xf32, #tpu.memory_space<vmem>>) attributes {dimension_semantics = [#tpu.dimension_semantics<parallel>], iteration_bounds = array<i64: 2>, scalar_prefetch = 0 : i64, scratch_operands = 0 : i64, tpu.core_type = #tpu.core_type<tc>, window_params = [{transform_indices = @transform_0, window_bounds = array<i64: 2, 128>}, {pipeline_mode = #tpu.pipeline_mode<synchronous>, transform_indices = @transform_1, window_bounds = array<i64: 32, 2>}, {pipeline_mode = #tpu.pipeline_mode<synchronous>, transform_indices = @transform_2, window_bounds = array<i64: 32, 1>}, {pipeline_mode = #tpu.pipeline_mode<synchronous>, transform_indices = @transform_3, window_bounds = array<i64: 32, 32>}, {pipeline_mode = #tpu.pipeline_mode<synchronous>, transform_indices = @transform_4, window_bounds = array<i64: 32, 1>}, {pipeline_mode = #tpu.pipeline_mode<synchronous>, transform_indices = @transform_5, window_bounds = array<i64: 32, 32>}, {pipeline_mode = #tpu.pipeline_mode<synchronous>, transform_indices = @transform_6, window_bounds = array<i64: 32, 1>}, {pipeline_mode = #tpu.pipeline_mode<synchronous>, transform_indices = @transform_7, window_bounds = array<i64: 1, 32>}, {pipeline_mode = #tpu.pipeline_mode<synchronous>, transform_indices = @transform_8, window_bounds = array<i64: 1, 1>}, {transform_indices = @transform_9, window_bounds = array<i64: 1, 128>}]} {
    %c0 = arith.constant 0 : index
    %c0_0 = arith.constant 0 : index
    %0 = vector.load %arg1[%c0, %c0_0] : memref<2x128xf32, #tpu.memory_space<vmem>>, vector<2x128xf32>
    %c0_1 = arith.constant 0 : index
    %c0_2 = arith.constant 0 : index
    %1 = vector.load %arg2[%c0_1, %c0_2] : memref<32x2xf32, #tpu.memory_space<vmem>>, vector<32x2xf32>
    %c0_3 = arith.constant 0 : index
    %c0_4 = arith.constant 0 : index
    %2 = vector.load %arg3[%c0_3, %c0_4] : memref<32x1xf32, #tpu.memory_space<vmem>>, vector<32x1xf32>
    %cst = arith.constant dense<0.000000e+00> : vector<32x128xf32>
    %3 = tpu.matmul %1, %0, %cst {dimension_numbers = #tpu.dot_dimension_numbers<[1], [0], [0], [1], [0, 0, 1, 1], [], []>} : vector<32x2xf32>, vector<2x128xf32>, vector<32x128xf32> -> vector<32x128xf32>
    %4 = vector.broadcast %2 : vector<32x1xf32> to vector<32x128xf32>
    %5 = arith.addf %3, %4 : vector<32x128xf32>
    %6 = math.tanh %5 : vector<32x128xf32>
    %c0_5 = arith.constant 0 : index
    %c0_6 = arith.constant 0 : index
    %7 = vector.load %arg4[%c0_5, %c0_6] : memref<32x32xf32, #tpu.memory_space<vmem>>, vector<32x32xf32>
    %c0_7 = arith.constant 0 : index
    %c0_8 = arith.constant 0 : index
    %8 = vector.load %arg5[%c0_7, %c0_8] : memref<32x1xf32, #tpu.memory_space<vmem>>, vector<32x1xf32>
    %cst_9 = arith.constant dense<0.000000e+00> : vector<32x128xf32>
    %9 = tpu.matmul %7, %6, %cst_9 {dimension_numbers = #tpu.dot_dimension_numbers<[1], [0], [0], [1], [0, 0, 1, 1], [], []>} : vector<32x32xf32>, vector<32x128xf32>, vector<32x128xf32> -> vector<32x128xf32>
    %10 = vector.broadcast %8 : vector<32x1xf32> to vector<32x128xf32>
    %11 = arith.addf %9, %10 : vector<32x128xf32>
    %12 = math.tanh %11 : vector<32x128xf32>
    %c0_10 = arith.constant 0 : index
    %c0_11 = arith.constant 0 : index
    %13 = vector.load %arg6[%c0_10, %c0_11] : memref<32x32xf32, #tpu.memory_space<vmem>>, vector<32x32xf32>
    %c0_12 = arith.constant 0 : index
    %c0_13 = arith.constant 0 : index
    %14 = vector.load %arg7[%c0_12, %c0_13] : memref<32x1xf32, #tpu.memory_space<vmem>>, vector<32x1xf32>
    %cst_14 = arith.constant dense<0.000000e+00> : vector<32x128xf32>
    %15 = tpu.matmul %13, %12, %cst_14 {dimension_numbers = #tpu.dot_dimension_numbers<[1], [0], [0], [1], [0, 0, 1, 1], [], []>} : vector<32x32xf32>, vector<32x128xf32>, vector<32x128xf32> -> vector<32x128xf32>
    %16 = vector.broadcast %14 : vector<32x1xf32> to vector<32x128xf32>
    %17 = arith.addf %15, %16 : vector<32x128xf32>
    %18 = math.tanh %17 : vector<32x128xf32>
    %c0_15 = arith.constant 0 : index
    %c0_16 = arith.constant 0 : index
    %19 = vector.load %arg8[%c0_15, %c0_16] : memref<1x32xf32, #tpu.memory_space<vmem>>, vector<1x32xf32>
    %c0_17 = arith.constant 0 : index
    %c0_18 = arith.constant 0 : index
    %20 = vector.load %arg9[%c0_17, %c0_18] : memref<1x1xf32, #tpu.memory_space<vmem>>, vector<1x1xf32>
    %cst_19 = arith.constant dense<0.000000e+00> : vector<1x128xf32>
    %21 = tpu.matmul %19, %18, %cst_19 {dimension_numbers = #tpu.dot_dimension_numbers<[1], [0], [0], [1], [0, 0, 1, 1], [], []>} : vector<1x32xf32>, vector<32x128xf32>, vector<1x128xf32> -> vector<1x128xf32>
    %22 = vector.broadcast %20 : vector<1x1xf32> to vector<1x128xf32>
    %23 = arith.addf %21, %22 : vector<1x128xf32>
    %c0_20 = arith.constant 0 : index
    %c0_21 = arith.constant 0 : index
    %24 = vector.load %arg10[%c0_20, %c0_21] : memref<1x128xf32, #tpu.memory_space<vmem>>, vector<1x128xf32>
    tpu.vector_store %arg10[%c0_20, %c0_21], %23 {strides = array<i32>} : memref<1x128xf32, #tpu.memory_space<vmem>>, vector<1x128xf32>,
    return
  }
  func.func @transform_0(%arg0: i32) -> (i32, i32) {
    %c0_i32 = arith.constant 0 : i32
    %c0_i32_0 = arith.constant 0 : i32
    return %c0_i32, %arg0 : i32, i32
  }
  func.func @transform_1(%arg0: i32) -> (i32, i32) {
    %c0_i32 = arith.constant 0 : i32
    %c0_i32_0 = arith.constant 0 : i32
    %c0_i32_1 = arith.constant 0 : i32
    return %c0_i32, %c0_i32_0 : i32, i32
  }
  func.func @transform_2(%arg0: i32) -> (i32, i32) {
    %c0_i32 = arith.constant 0 : i32
    %c0_i32_0 = arith.constant 0 : i32
    %c0_i32_1 = arith.constant 0 : i32
    return %c0_i32, %c0_i32_0 : i32, i32
  }
  func.func @transform_3(%arg0: i32) -> (i32, i32) {
    %c0_i32 = arith.constant 0 : i32
    %c0_i32_0 = arith.constant 0 : i32
    %c0_i32_1 = arith.constant 0 : i32
    return %c0_i32, %c0_i32_0 : i32, i32
  }
  func.func @transform_4(%arg0: i32) -> (i32, i32) {
    %c0_i32 = arith.constant 0 : i32
    %c0_i32_0 = arith.constant 0 : i32
    %c0_i32_1 = arith.constant 0 : i32
    return %c0_i32, %c0_i32_0 : i32, i32
  }
  func.func @transform_5(%arg0: i32) -> (i32, i32) {
    %c0_i32 = arith.constant 0 : i32
    %c0_i32_0 = arith.constant 0 : i32
    %c0_i32_1 = arith.constant 0 : i32
    return %c0_i32, %c0_i32_0 : i32, i32
  }
  func.func @transform_6(%arg0: i32) -> (i32, i32) {
    %c0_i32 = arith.constant 0 : i32
    %c0_i32_0 = arith.constant 0 : i32
    %c0_i32_1 = arith.constant 0 : i32
    return %c0_i32, %c0_i32_0 : i32, i32
  }
  func.func @transform_7(%arg0: i32) -> (i32, i32) {
    %c0_i32 = arith.constant 0 : i32
    %c0_i32_0 = arith.constant 0 : i32
    %c0_i32_1 = arith.constant 0 : i32
    return %c0_i32, %c0_i32_0 : i32, i32
  }
  func.func @transform_8(%arg0: i32) -> (i32, i32) {
    %c0_i32 = arith.constant 0 : i32
    %c0_i32_0 = arith.constant 0 : i32
    %c0_i32_1 = arith.constant 0 : i32
    return %c0_i32, %c0_i32_0 : i32, i32
  }
  func.func @transform_9(%arg0: i32) -> (i32, i32) {
    %c0_i32 = arith.constant 0 : i32
    %c0_i32_0 = arith.constant 0 : i32
    return %c0_i32, %arg0 : i32, i32
  }
}

</mosaic_0001>

<llo_original>
// kernel: tpu_custom_call.1
$region0: #{tpu_custom_call.1}
  #allocation0 [shape = 'u32[]', space=smem, size = 0x4, offset = 0x4, fixed_abs, tag = 'smem constant byte address 0x4 - core index']
  #allocation1 [shape = 'u32[72,128]{1,0:T(1,128)}', space=vmem, size = 0x9000, scoped, tag = 'internal scratch']
  #allocation2 [shape = 'f32[1,1]{1,0:T(1,128)S(1)}', space=vmem, size = 0x200, scoped, tag = 'scoped memory for tpu_custom_call.1']
  %s0 = inlined_call_operand.vmem [shape: f32[2,256], index: 0, kind: input, shape index: {}]
  %s1 = inlined_call_operand.vmem [shape: f32[32,2], index: 1, kind: input, shape index: {}]
  %s2 = inlined_call_operand.vmem [shape: f32[32,1], index: 2, kind: input, shape index: {}]
  %s3 = inlined_call_operand.vmem [shape: f32[32,32], index: 3, kind: input, shape index: {}]
  %s4 = inlined_call_operand.vmem [shape: f32[32,1], index: 4, kind: input, shape index: {}]
  %s5 = inlined_call_operand.vmem [shape: f32[32,32], index: 5, kind: input, shape index: {}]
  %s6 = inlined_call_operand.vmem [shape: f32[32,1], index: 6, kind: input, shape index: {}]
  %s7 = inlined_call_operand.vmem [shape: f32[1,32], index: 7, kind: input, shape index: {}]
  %s8 = inlined_call_operand.<no memory space> [shape: f32[1,1], index: 8, kind: input, shape index: {}]
  %s9 = inlined_call_operand.hbm [shape: f32[1,256], index: 9, kind: output, shape index: {}]
  %s10 = sld [smem:[#allocation0]]
  $region69: #{tpu_custom_call.1} parent=0
    _
  %s12 = ssub.s32 1, %s10
  %s13 = scalar_select 0, %s12, %s10
  %v14 = vstv %s8
  %15 = vst [vmem:[#allocation2] sm:$0x1] %v14
  $region1: #{tpu_custom_call.1} parent=0
    #allocation3 [shape = 'u8[1024]{0}', space=vmem, size = 0x400, scoped, tag = 'output window, operand 0']
    #allocation4 [shape = 's32[2]{0}', space=sflag, size = 0x8, scoped, tag = 'scoped memory for tpu_custom_call.1']
    %16 = vsyncpa [#allocation4], 0
    %s17 = scalar_lea.sflag [#allocation4], 1
    %18 = vsyncpa %s17, 0
    loop: start=0, step=1, limit=4
    $region2: #{tpu_custom_call.1} parent=1 // loop_pre_header
      _
    $region3: #{tpu_custom_call.1} parent=1 // loop_header
      %s20 = sphi 0, %s24
      %p21 = scmp.ge.s32.totalorder %s20, 4
      %s30 = sphi 0, %s32
      %s33 = sphi 0, %s30
      %s34 = sphi 0, %s33
      %s50 = sphi 0, %s34
      %s54 = sphi 0, %s54
      %s56 = sphi 0, %s54
      %s57 = sphi 0, %s56
      %s71 = sphi 0, %s57
      %s75 = sphi 0, %s75
      %s77 = sphi 0, %s75
      %s78 = sphi 0, %s77
      %s92 = sphi 0, %s78
      %s96 = sphi 0, %s96
      %s98 = sphi 0, %s96
      %s99 = sphi 0, %s98
      %s113 = sphi 0, %s99
      %s117 = sphi 0, %s117
      %s119 = sphi 0, %s117
      %s120 = sphi 0, %s119
      %s134 = sphi 0, %s120
      %s138 = sphi 0, %s138
      %s140 = sphi 0, %s138
      %s141 = sphi 0, %s140
      %s155 = sphi 0, %s141
      %s159 = sphi 0, %s159
      %s161 = sphi 0, %s159
      %s162 = sphi 0, %s161
      %s176 = sphi 0, %s162
      %s180 = sphi 0, %s180
      %s182 = sphi 0, %s180
      %s183 = sphi 0, %s182
      %s197 = sphi 0, %s183
      %s201 = sphi 0, %s201
      %s203 = sphi 0, %s201
      %s204 = sphi 0, %s203
      %s218 = sphi 0, %s204
      %s224 = sphi 0, %s226
      %s227 = sphi 0, %s224
      %s228 = sphi 0, %s227
      %s244 = sphi 0, %s228
    $region4: #{tpu_custom_call.1} parent=1 // loop_header_branch
      %23 = sbr.rel (%p21) target = $region8
    $region5: #{tpu_custom_call.1} parent=1 // loop_body
      %s25 = ssub.s32 %s20, 1
      %s26 = ssub.s32 %s20, 2
      %s27 = sadd.s32 %s20, 1
      %s28 = ssub.s32 %s20, %s27
      %p29 = scmp.eq.s32.totalorder %s28, 0
      %s31 = sadd.s32 %s30, 1
      %s32 = scalar_select %p29, %s30, %s31
      %p35 = pneg %p29
      %p36 = scmp.eq.s32.totalorder %s20, 1
      %p37 = por %p35, %p36
      %p38 = scmp.ne.s32.totalorder %s30, %s33
      %p39 = scmp.eq.s32.totalorder %s20, 0
      %p40 = por %p38, %p39
      %p41 = scmp.ne.s32.totalorder %s30, %s33
      %p42 = scmp.eq.s32.totalorder %s25, 1
      %p43 = por %p41, %p42
      %p44 = scmp.ne.s32.totalorder %s33, %s34
      %p45 = scmp.eq.s32.totalorder %s25, 0
      %p46 = por %p44, %p45
      %p47 = scmp.ne.s32.totalorder %s33, %s34
      %p48 = scmp.eq.s32.totalorder %s26, 1
      %p49 = por %p47, %p48
      %p51 = scmp.ne.s32.totalorder %s34, %s50
      %p52 = scmp.eq.s32.totalorder %s26, 0
      %p53 = por %p51, %p52
      %s55 = sadd.s32 %s54, 1
      %p58 = scmp.eq.s32.totalorder %s20, 1
      %p59 = scmp.ne.s32.totalorder %s54, %s56
      %p60 = scmp.eq.s32.totalorder %s20, 0
      %p61 = por %p59, %p60
      %p62 = scmp.ne.s32.totalorder %s54, %s56
      %p63 = scmp.eq.s32.totalorder %s25, 1
      %p64 = por %p62, %p63
      %p65 = scmp.ne.s32.totalorder %s56, %s57
      %p66 = scmp.eq.s32.totalorder %s25, 0
      %p67 = por %p65, %p66
      %p68 = scmp.ne.s32.totalorder %s56, %s57
      %p69 = scmp.eq.s32.totalorder %s26, 1
      %p70 = por %p68, %p69
      %p72 = scmp.ne.s32.totalorder %s57, %s71
      %p73 = scmp.eq.s32.totalorder %s26, 0
      %p74 = por %p72, %p73
      %s76 = sadd.s32 %s75, 1
      %p79 = scmp.eq.s32.totalorder %s20, 1
      %p80 = scmp.ne.s32.totalorder %s75, %s77
      %p81 = scmp.eq.s32.totalorder %s20, 0
      %p82 = por %p80, %p81
      %p83 = scmp.ne.s32.totalorder %s75, %s77
      %p84 = scmp.eq.s32.totalorder %s25, 1
      %p85 = por %p83, %p84
      %p86 = scmp.ne.s32.totalorder %s77, %s78
      %p87 = scmp.eq.s32.totalorder %s25, 0
      %p88 = por %p86, %p87
      %p89 = scmp.ne.s32.totalorder %s77, %s78
      %p90 = scmp.eq.s32.totalorder %s26, 1
      %p91 = por %p89, %p90
      %p93 = scmp.ne.s32.totalorder %s78, %s92
      %p94 = scmp.eq.s32.totalorder %s26, 0
      %p95 = por %p93, %p94
      %s97 = sadd.s32 %s96, 1
      %p100 = scmp.eq.s32.totalorder %s20, 1
      %p101 = scmp.ne.s32.totalorder %s96, %s98
      %p102 = scmp.eq.s32.totalorder %s20, 0
      %p103 = por %p101, %p102
      %p104 = scmp.ne.s32.totalorder %s96, %s98
      %p105 = scmp.eq.s32.totalorder %s25, 1
      %p106 = por %p104, %p105
      %p107 = scmp.ne.s32.totalorder %s98, %s99
      %p108 = scmp.eq.s32.totalorder %s25, 0
      %p109 = por %p107, %p108
      %p110 = scmp.ne.s32.totalorder %s98, %s99
      %p111 = scmp.eq.s32.totalorder %s26, 1
      %p112 = por %p110, %p111
      %p114 = scmp.ne.s32.totalorder %s99, %s113
      %p115 = scmp.eq.s32.totalorder %s26, 0
      %p116 = por %p114, %p115
      %s118 = sadd.s32 %s117, 1
      %p121 = scmp.eq.s32.totalorder %s20, 1
      %p122 = scmp.ne.s32.totalorder %s117, %s119
      %p123 = scmp.eq.s32.totalorder %s20, 0
      %p124 = por %p122, %p123
      %p125 = scmp.ne.s32.totalorder %s117, %s119
      %p126 = scmp.eq.s32.totalorder %s25, 1
      %p127 = por %p125, %p126
      %p128 = scmp.ne.s32.totalorder %s119, %s120
      %p129 = scmp.eq.s32.totalorder %s25, 0
      %p130 = por %p128, %p129
      %p131 = scmp.ne.s32.totalorder %s119, %s120
      %p132 = scmp.eq.s32.totalorder %s26, 1
      %p133 = por %p131, %p132
      %p135 = scmp.ne.s32.totalorder %s120, %s134
      %p136 = scmp.eq.s32.totalorder %s26, 0
      %p137 = por %p135, %p136
      %s139 = sadd.s32 %s138, 1
      %p142 = scmp.eq.s32.totalorder %s20, 1
      %p143 = scmp.ne.s32.totalorder %s138, %s140
      %p144 = scmp.eq.s32.totalorder %s20, 0
      %p145 = por %p143, %p144
      %p146 = scmp.ne.s32.totalorder %s138, %s140
      %p147 = scmp.eq.s32.totalorder %s25, 1
      %p148 = por %p146, %p147
      %p149 = scmp.ne.s32.totalorder %s140, %s141
      %p150 = scmp.eq.s32.totalorder %s25, 0
      %p151 = por %p149, %p150
      %p152 = scmp.ne.s32.totalorder %s140, %s141
      %p153 = scmp.eq.s32.totalorder %s26, 1
      %p154 = por %p152, %p153
      %p156 = scmp.ne.s32.totalorder %s141, %s155
      %p157 = scmp.eq.s32.totalorder %s26, 0
      %p158 = por %p156, %p157
      %s160 = sadd.s32 %s159, 1
      %p163 = scmp.eq.s32.totalorder %s20, 1
      %p164 = scmp.ne.s32.totalorder %s159, %s161
      %p165 = scmp.eq.s32.totalorder %s20, 0
      %p166 = por %p164, %p165
      %p167 = scmp.ne.s32.totalorder %s159, %s161
      %p168 = scmp.eq.s32.totalorder %s25, 1
      %p169 = por %p167, %p168
      %p170 = scmp.ne.s32.totalorder %s161, %s162
      %p171 = scmp.eq.s32.totalorder %s25, 0
      %p172 = por %p170, %p171
      %p173 = scmp.ne.s32.totalorder %s161, %s162
      %p174 = scmp.eq.s32.totalorder %s26, 1
      %p175 = por %p173, %p174
      %p177 = scmp.ne.s32.totalorder %s162, %s176
      %p178 = scmp.eq.s32.totalorder %s26, 0
      %p179 = por %p177, %p178
      %s181 = sadd.s32 %s180, 1
      %p184 = scmp.eq.s32.totalorder %s20, 1
      %p185 = scmp.ne.s32.totalorder %s180, %s182
      %p186 = scmp.eq.s32.totalorder %s20, 0
      %p187 = por %p185, %p186
      %p188 = scmp.ne.s32.totalorder %s180, %s182
      %p189 = scmp.eq.s32.totalorder %s25, 1
      %p190 = por %p188, %p189
      %p191 = scmp.ne.s32.totalorder %s182, %s183
      %p192 = scmp.eq.s32.totalorder %s25, 0
      %p193 = por %p191, %p192
      %p194 = scmp.ne.s32.totalorder %s182, %s183
      %p195 = scmp.eq.s32.totalorder %s26, 1
      %p196 = por %p194, %p195
      %p198 = scmp.ne.s32.totalorder %s183, %s197
      %p199 = scmp.eq.s32.totalorder %s26, 0
      %p200 = por %p198, %p199
      %s202 = sadd.s32 %s201, 1
      %p205 = scmp.eq.s32.totalorder %s20, 1
      %p206 = scmp.ne.s32.totalorder %s201, %s203
      %p207 = scmp.eq.s32.totalorder %s20, 0
      %p208 = por %p206, %p207
      %p209 = scmp.ne.s32.totalorder %s201, %s203
      %p210 = scmp.eq.s32.totalorder %s25, 1
      %p211 = por %p209, %p210
      %p212 = scmp.ne.s32.totalorder %s203, %s204
      %p213 = scmp.eq.s32.totalorder %s25, 0
      %p214 = por %p212, %p213
      %p215 = scmp.ne.s32.totalorder %s203, %s204
      %p216 = scmp.eq.s32.totalorder %s26, 1
      %p217 = por %p215, %p216
      %p219 = scmp.ne.s32.totalorder %s204, %s218
      %p220 = scmp.eq.s32.totalorder %s26, 0
      %p221 = por %p219, %p220
      %s222 = ssub.s32 %s20, %s27
      %p223 = scmp.eq.s32.totalorder %s222, 0
      %s225 = sadd.s32 %s224, 1
      %s226 = scalar_select %p223, %s224, %s225
      %p229 = pneg %p223
      %p230 = scmp.eq.s32.totalorder %s20, 1
      %p231 = por %p229, %p230
      %p232 = scmp.ne.s32.totalorder %s224, %s227
      %p233 = scmp.eq.s32.totalorder %s20, 0
      %p234 = por %p232, %p233
      %p235 = scmp.ne.s32.totalorder %s224, %s227
      %p236 = scmp.eq.s32.totalorder %s25, 1
      %p237 = por %p235, %p236
      %p238 = scmp.ne.s32.totalorder %s227, %s228
      %p239 = scmp.eq.s32.totalorder %s25, 0
      %p240 = por %p238, %p239
      %p241 = scmp.ne.s32.totalorder %s227, %s228
      %p242 = scmp.eq.s32.totalorder %s26, 1
      %p243 = por %p241, %p242
      %p245 = scmp.ne.s32.totalorder %s228, %s244
      %p246 = scmp.eq.s32.totalorder %s26, 0
      %p247 = por %p245, %p246
      %p248 = scmp.le.s32.totalorder 1, %s20
      %p249 = scmp.lt.s32.totalorder %s20, 3
      %p250 = pnand %p248, %p249
      %p251 = pneg %p250
      // Predicated region
      $region9: #{tpu_custom_call.1} parent=5 // pred_check
        _
      $region10: #{tpu_custom_call.1} parent=5 // pred_check_branch
        %253 = sbr.rel (%p250) target = $region12
      $region11: #{tpu_custom_call.1} parent=5 // pred_region
        %s254 = ssub.s32 %s20, 1
        // Predicated region
        $region13: #{tpu_custom_call.1} parent=11 // pred_check
          %p255 = pneg %p67
        $region14: #{tpu_custom_call.1} parent=11 // pred_check_branch
          %257 = sbr.rel (%p255) target = $region16
        $region15: #{tpu_custom_call.1} parent=11 // pred_region
          _
        $region16: #{tpu_custom_call.1} parent=11 // pred_fallthru
          _
        // Predicated region
        $region17: #{tpu_custom_call.1} parent=11 // pred_check
          %p258 = pneg %p88
        $region18: #{tpu_custom_call.1} parent=11 // pred_check_branch
          %260 = sbr.rel (%p258) target = $region20
        $region19: #{tpu_custom_call.1} parent=11 // pred_region
          _
        $region20: #{tpu_custom_call.1} parent=11 // pred_fallthru
          _
        // Predicated region
        $region21: #{tpu_custom_call.1} parent=11 // pred_check
          %p261 = pneg %p109
        $region22: #{tpu_custom_call.1} parent=11 // pred_check_branch
          %263 = sbr.rel (%p261) target = $region24
        $region23: #{tpu_custom_call.1} parent=11 // pred_region
          _
        $region24: #{tpu_custom_call.1} parent=11 // pred_fallthru
          _
        // Predicated region
        $region25: #{tpu_custom_call.1} parent=11 // pred_check
          %p264 = pneg %p130
        $region26: #{tpu_custom_call.1} parent=11 // pred_check_branch
          %266 = sbr.rel (%p264) target = $region28
        $region27: #{tpu_custom_call.1} parent=11 // pred_region
          _
        $region28: #{tpu_custom_call.1} parent=11 // pred_fallthru
          _
        // Predicated region
        $region29: #{tpu_custom_call.1} parent=11 // pred_check
          %p267 = pneg %p151
        $region30: #{tpu_custom_call.1} parent=11 // pred_check_branch
          %269 = sbr.rel (%p267) target = $region32
        $region31: #{tpu_custom_call.1} parent=11 // pred_region
          _
        $region32: #{tpu_custom_call.1} parent=11 // pred_fallthru
          _
        // Predicated region
        $region33: #{tpu_custom_call.1} parent=11 // pred_check
          %p270 = pneg %p172
        $region34: #{tpu_custom_call.1} parent=11 // pred_check_branch
          %272 = sbr.rel (%p270) target = $region36
        $region35: #{tpu_custom_call.1} parent=11 // pred_region
          _
        $region36: #{tpu_custom_call.1} parent=11 // pred_fallthru
          _
        // Predicated region
        $region37: #{tpu_custom_call.1} parent=11 // pred_check
          %p273 = pneg %p193
        $region38: #{tpu_custom_call.1} parent=11 // pred_check_branch
          %275 = sbr.rel (%p273) target = $region40
        $region39: #{tpu_custom_call.1} parent=11 // pred_region
          _
        $region40: #{tpu_custom_call.1} parent=11 // pred_fallthru
          _
        // Predicated region
        $region41: #{tpu_custom_call.1} parent=11 // pred_check
          %p276 = pneg %p214
        $region42: #{tpu_custom_call.1} parent=11 // pred_check_branch
          %278 = sbr.rel (%p276) target = $region44
        $region43: #{tpu_custom_call.1} parent=11 // pred_region
          _
        $region44: #{tpu_custom_call.1} parent=11 // pred_fallthru
          _
      $region12: #{tpu_custom_call.1} parent=5 // pred_fallthru
        _
      %p279 = scmp.lt.s32.totalorder %s20, 2
      // Predicated region
      $region45: #{tpu_custom_call.1} parent=5 // pred_check
        %p280 = pneg %p279
      $region46: #{tpu_custom_call.1} parent=5 // pred_check_branch
        %282 = sbr.rel (%p280) target = $region48
      $region47: #{tpu_custom_call.1} parent=5 // pred_region
        // Predicated region
        $region49: #{tpu_custom_call.1} parent=47 // pred_check
          %p283 = pneg %p40
        $region50: #{tpu_custom_call.1} parent=47 // pred_check_branch
          %285 = sbr.rel (%p283) target = $region52
        $region51: #{tpu_custom_call.1} parent=47 // pred_region
          %p286 = scmp.lt.s32.totalorder %s20, 1
          %s287 = scalar_select %p286, %s20, 1
          %s288 = smul.addr %s287, 2
          %s289 = scalar_lea.vmem %s0, %s288
        $region52: #{tpu_custom_call.1} parent=47 // pred_fallthru
          _
      $region48: #{tpu_custom_call.1} parent=5 // pred_fallthru
        _
      %p290 = scmp.le.s32.totalorder 1, %s20
      %p291 = scmp.lt.s32.totalorder %s20, 3
      %p292 = pnand %p290, %p291
      %p293 = pneg %p292
      // Predicated region
      $region53: #{tpu_custom_call.1} parent=5 // pred_check
        _
      $region54: #{tpu_custom_call.1} parent=5 // pred_check_branch
        %295 = sbr.rel (%p292) target = $region56
      $region55: #{tpu_custom_call.1} parent=5 // pred_region
        %s296 = ssub.s32 %s20, 1
        %p297 = scmp.lt.s32.totalorder %s25, 1
        %s298 = scalar_select %p297, %s25, 1
        %s299 = smul.addr %s298, 2
        %s300 = scalar_lea.vmem %s0, %s299
        %p301 = pneg %p46
        %p302 = pneg %p43
        %p303 = pneg %p67
        %p304 = pneg %p64
        %p305 = pneg %p88
        %p306 = pneg %p85
        %p307 = pneg %p109
        %p308 = pneg %p106
        %p309 = pneg %p130
        %p310 = pneg %p127
        %p311 = pneg %p151
        %p312 = pneg %p148
        %p313 = pneg %p172
        %p314 = pneg %p169
        %p315 = pneg %p193
        %p316 = pneg %p190
        %p317 = pneg %p214
        %p318 = pneg %p211
        %p319 = pneg %p240
        %p320 = pneg %p237
        %s321 = sand.u32 %s227, 1
        %s322 = scalar_lea.sflag [#allocation4], %s321
        %s323 = sand.u32 %s227, 1
        %s324 = scalar_lea.vmem [#allocation3], %s323
        %p325 = scmp.lt.s32.totalorder %s25, 1
        %s326 = scalar_select %p325, %s25, 1
        %s327 = smul.addr %s326, 2
        %s328 = scalar_lea.vmem %s0, %s327
        %v329 = vld [vmem:[%s328] sm:$0x3]
        %v330 = vld [vmem:[%s1] sm:$0xff]
        %v331 = vld [vmem:[%s1 + $0x8] sm:$0xff]
        %v332 = vld [vmem:[%s1 + $0x10] sm:$0xff]
        %v333 = vld [vmem:[%s1 + $0x18] sm:$0xff]
        %v334 = vld [vmem:[%s2] sm:$0xff]
        %v335 = vld [vmem:[%s2 + $0x8] sm:$0xff]
        %v336 = vld [vmem:[%s2 + $0x10] sm:$0xff]
        %v337 = vld [vmem:[%s2 + $0x18] sm:$0xff]
        %339 = vset.pattern.permute.xlu0 0
        %340 = vperm.xlu0 %339, %v334
        %v341 = vpop.permute.xlu0 %340
        %344 = vset.pattern.permute.xlu0 0
        %345 = vperm.xlu0 %344, %v335
        %v346 = vpop.permute.xlu0 %345
        %349 = vset.pattern.permute.xlu0 0
        %350 = vperm.xlu0 %349, %v336
        %v351 = vpop.permute.xlu0 %350
        %354 = vset.pattern.permute.xlu0 0
        %355 = vperm.xlu0 %354, %v337
        %v356 = vpop.permute.xlu0 %355
        %vm358 = vcmask 15360
        %v360 = vsel %vm358, %v330, 0
        %v363 = vsel %vm358, %v331, 0
        %v366 = vsel %vm358, %v332, 0
        %v369 = vsel %vm358, %v333, 0
        %vm371 = vcmask 1041408
        %v373 = vsel %vm371, %v329, 0
        %375 = vmatpush.msra.mxu0 0.0
        %376 = vmatpush.msra.mxu0 0.0
        %377 = vmatpush.msra.mxu0 0.0
        %378 = vmatpush.msra.mxu0 0.0
        %379 = vmatpush.msra.mxu0 0.0
        %380 = vmatpush.msra.mxu0 0.0
        %381 = vmatpush.msra.mxu0 0.0
        %382 = vmatpush.msra.mxu0 0.0
        %383 = vmatpush.msra.mxu0 0.0
        %384 = vmatpush.msra.mxu0 0.0
        %385 = vmatpush.msra.mxu0 0.0
        %386 = vmatpush.msra.mxu0 0.0
        %387 = vmatpush.msra.mxu0 0.0
        %388 = vmatpush.msra.mxu0 0.0
        %389 = vmatpush.msra.mxu0 0.0
        %390 = vmatpush.msra.mxu0 %v373
        %391 = vmatmul.f32.gmra.mxu0 %v360
        %v392 = vpop.f32.mrf.mxu0
        %v393 = vadd.f32 %v341, %v392
        %394 = vmatmul.f32.gmra.mxu0 %v363
        %v395 = vpop.f32.mrf.mxu0
        %v396 = vadd.f32 %v346, %v395
        %397 = vmatmul.f32.gmra.mxu0 %v366
        %v398 = vpop.f32.mrf.mxu0
        %v399 = vadd.f32 %v351, %v398
        %400 = vmatmul.f32.gmra.mxu0 %v369
        %v401 = vpop.f32.mrf.mxu0
        %v402 = vadd.f32 %v356, %v401
        %403 = vdwg.mxu0
        %v404 = vtanh.pop %v393
        %v405 = vtanh.pop %v396
        %v406 = vtanh.pop %v399
        %v407 = vtanh.pop %v402
        %v408 = vld [vmem:[%s3] sm:$0xff]
        %v409 = vld [vmem:[%s3 + $0x8] sm:$0xff]
        %v410 = vld [vmem:[%s3 + $0x10] sm:$0xff]
        %v411 = vld [vmem:[%s3 + $0x18] sm:$0xff]
        %v412 = vld [vmem:[%s4] sm:$0xff]
        %v413 = vld [vmem:[%s4 + $0x8] sm:$0xff]
        %v414 = vld [vmem:[%s4 + $0x10] sm:$0xff]
        %v415 = vld [vmem:[%s4 + $0x18] sm:$0xff]
        %417 = vset.pattern.permute.xlu0 0
        %418 = vperm.xlu0 %417, %v412
        %v419 = vpop.permute.xlu0 %418
        %422 = vset.pattern.permute.xlu0 0
        %423 = vperm.xlu0 %422, %v413
        %v424 = vpop.permute.xlu0 %423
        %427 = vset.pattern.permute.xlu0 0
        %428 = vperm.xlu0 %427, %v414
        %v429 = vpop.permute.xlu0 %428
        %432 = vset.pattern.permute.xlu0 0
        %433 = vperm.xlu0 %432, %v415
        %v434 = vpop.permute.xlu0 %433
        %vm436 = vcmask 261120
        %v438 = vsel %vm436, %v408, 0
        %v441 = vsel %vm436, %v409, 0
        %v444 = vsel %vm436, %v410, 0
        %v447 = vsel %vm436, %v411, 0
        %449 = vmatpush.msra.mxu0 0.0
        %450 = vmatpush.msra.mxu0 0.0
        %451 = vmatpush.msra.mxu0 0.0
        %452 = vmatpush.msra.mxu0 0.0
        %453 = vmatpush.msra.mxu0 0.0
        %454 = vmatpush.msra.mxu0 0.0
        %455 = vmatpush.msra.mxu0 0.0
        %456 = vmatpush.msra.mxu0 0.0
        %457 = vmatpush.msra.mxu0 0.0
        %458 = vmatpush.msra.mxu0 0.0
        %459 = vmatpush.msra.mxu0 0.0
        %460 = vmatpush.msra.mxu0 0.0
        %461 = vmatpush.msra.mxu0 %v407
        %462 = vmatpush.msra.mxu0 %v406
        %463 = vmatpush.msra.mxu0 %v405
        %464 = vmatpush.msra.mxu0 %v404
        %465 = vmatmul.f32.gmra.mxu0 %v438
        %v466 = vpop.f32.mrf.mxu0
        %v467 = vadd.f32 %v419, %v466
        %468 = vmatmul.f32.gmra.mxu0 %v441
        %v469 = vpop.f32.mrf.mxu0
        %v470 = vadd.f32 %v424, %v469
        %471 = vmatmul.f32.gmra.mxu0 %v444
        %v472 = vpop.f32.mrf.mxu0
        %v473 = vadd.f32 %v429, %v472
        %474 = vmatmul.f32.gmra.mxu0 %v447
        %v475 = vpop.f32.mrf.mxu0
        %v476 = vadd.f32 %v434, %v475
        %477 = vdwg.mxu0
        %v478 = vtanh.pop %v467
        %v479 = vtanh.pop %v470
        %v480 = vtanh.pop %v473
        %v481 = vtanh.pop %v476
        %v482 = vld [vmem:[%s5] sm:$0xff]
        %v483 = vld [vmem:[%s5 + $0x8] sm:$0xff]
        %v484 = vld [vmem:[%s5 + $0x10] sm:$0xff]
        %v485 = vld [vmem:[%s5 + $0x18] sm:$0xff]
        %v486 = vld [vmem:[%s6] sm:$0xff]
        %v487 = vld [vmem:[%s6 + $0x8] sm:$0xff]
        %v488 = vld [vmem:[%s6 + $0x10] sm:$0xff]
        %v489 = vld [vmem:[%s6 + $0x18] sm:$0xff]
        %491 = vset.pattern.permute.xlu0 0
        %492 = vperm.xlu0 %491, %v486
        %v493 = vpop.permute.xlu0 %492
        %496 = vset.pattern.permute.xlu0 0
        %497 = vperm.xlu0 %496, %v487
        %v498 = vpop.permute.xlu0 %497
        %501 = vset.pattern.permute.xlu0 0
        %502 = vperm.xlu0 %501, %v488
        %v503 = vpop.permute.xlu0 %502
        %506 = vset.pattern.permute.xlu0 0
        %507 = vperm.xlu0 %506, %v489
        %v508 = vpop.permute.xlu0 %507
        %v511 = vsel %vm436, %v482, 0
        %v514 = vsel %vm436, %v483, 0
        %v517 = vsel %vm436, %v484, 0
        %v520 = vsel %vm436, %v485, 0
        %522 = vmatpush.msra.mxu0 0.0
        %523 = vmatpush.msra.mxu0 0.0
        %524 = vmatpush.msra.mxu0 0.0
        %525 = vmatpush.msra.mxu0 0.0
        %526 = vmatpush.msra.mxu0 0.0
        %527 = vmatpush.msra.mxu0 0.0
        %528 = vmatpush.msra.mxu0 0.0
        %529 = vmatpush.msra.mxu0 0.0
        %530 = vmatpush.msra.mxu0 0.0
        %531 = vmatpush.msra.mxu0 0.0
        %532 = vmatpush.msra.mxu0 0.0
        %533 = vmatpush.msra.mxu0 0.0
        %534 = vmatpush.msra.mxu0 %v481
        %535 = vmatpush.msra.mxu0 %v480
        %536 = vmatpush.msra.mxu0 %v479
        %537 = vmatpush.msra.mxu0 %v478
        %538 = vmatmul.f32.gmra.mxu0 %v511
        %v539 = vpop.f32.mrf.mxu0
        %v540 = vadd.f32 %v493, %v539
        %541 = vmatmul.f32.gmra.mxu0 %v514
        %v542 = vpop.f32.mrf.mxu0
        %v543 = vadd.f32 %v498, %v542
        %544 = vmatmul.f32.gmra.mxu0 %v517
        %v545 = vpop.f32.mrf.mxu0
        %v546 = vadd.f32 %v503, %v545
        %547 = vmatmul.f32.gmra.mxu0 %v520
        %v548 = vpop.f32.mrf.mxu0
        %v549 = vadd.f32 %v508, %v548
        %550 = vdwg.mxu0
        %v551 = vtanh.pop %v540
        %v552 = vtanh.pop %v543
        %v553 = vtanh.pop %v546
        %v554 = vtanh.pop %v549
        %v555 = vld [vmem:[%s7] sm:$0x1]
        %v556 = vld [vmem:[#allocation2] sm:$0x1]
        %558 = vset.pattern.permute.xlu0 0
        %559 = vperm.xlu0 %558, %v556
        %v560 = vpop.permute.xlu0 %559
        %v562 = vperm.slane %v560, 0
        %v564 = vsel %vm436, %v555, 0
        %566 = vmatpush.msra.mxu0 0.0
        %567 = vmatpush.msra.mxu0 0.0
        %568 = vmatpush.msra.mxu0 0.0
        %569 = vmatpush.msra.mxu0 0.0
        %570 = vmatpush.msra.mxu0 0.0
        %571 = vmatpush.msra.mxu0 0.0
        %572 = vmatpush.msra.mxu0 0.0
        %573 = vmatpush.msra.mxu0 0.0
        %574 = vmatpush.msra.mxu0 0.0
        %575 = vmatpush.msra.mxu0 0.0
        %576 = vmatpush.msra.mxu0 0.0
        %577 = vmatpush.msra.mxu0 0.0
        %578 = vmatpush.msra.mxu0 %v554
        %579 = vmatpush.msra.mxu0 %v553
        %580 = vmatpush.msra.mxu0 %v552
        %581 = vmatpush.msra.mxu0 %v551
        %582 = vmatmul.f32.gmra.mxu0 %v564
        %v583 = vpop.f32.mrf.mxu0
        %v584 = vadd.f32 %v562, %v583
        %585 = vdwg.mxu0
        %586 = vst [vmem:[%s324] sm:$0x1] %v584
        %s587 = sand.u32 %s227, 1
        %s588 = scalar_lea.sflag [#allocation4], %s587
        %s589 = sand.u32 %s227, 1
        %s590 = scalar_lea.vmem [#allocation3], %s589
        // Predicated region
        $region57: #{tpu_custom_call.1} parent=55 // pred_check
          %p591 = pneg %p237
        $region58: #{tpu_custom_call.1} parent=55 // pred_check_branch
          %593 = sbr.rel (%p591) target = $region60
        $region59: #{tpu_custom_call.1} parent=55 // pred_region
          %595 = vsyncadd %s588, 0
          %s596 = scalar_lea.hbm %s9, %s25
          %s598 = sshll.u32 %s590, 4
          %s599 = int_to_ptr.vmem [resolvable:$true] %s598
          %s600 = sshll.u32 %s596, 4
          %s601 = int_to_ptr.hbm [resolvable:$true] %s600
          %603 = dma.vmem_to_hbm [thread:$0]  %s599, 16, %s601, %s588
        $region60: #{tpu_custom_call.1} parent=55 // pred_fallthru
          _
      $region56: #{tpu_custom_call.1} parent=5 // pred_fallthru
        _
      %p604 = scmp.le.s32.totalorder 2, %s20
      // Predicated region
      $region61: #{tpu_custom_call.1} parent=5 // pred_check
        %p605 = pneg %p604
      $region62: #{tpu_custom_call.1} parent=5 // pred_check_branch
        %607 = sbr.rel (%p605) target = $region64
      $region63: #{tpu_custom_call.1} parent=5 // pred_region
        %s608 = ssub.s32 %s20, 2
        // Predicated region
        $region65: #{tpu_custom_call.1} parent=63 // pred_check
          %p609 = pneg %p243
        $region66: #{tpu_custom_call.1} parent=63 // pred_check_branch
          %611 = sbr.rel (%p609) target = $region68
        $region67: #{tpu_custom_call.1} parent=63 // pred_region
          %s612 = sand.u32 %s228, 1
          %s613 = scalar_lea.sflag [#allocation4], %s612
          %s614 = sand.u32 %s228, 1
          %s615 = scalar_lea.vmem [#allocation3], %s614
          %617 = dma.done %s613, 16
        $region68: #{tpu_custom_call.1} parent=63 // pred_fallthru
          _
      $region64: #{tpu_custom_call.1} parent=5 // pred_fallthru
        _
    $region6: #{tpu_custom_call.1} parent=1 // loop_footer
      %s24 = sadd.s32 1, %s20
    $region7: #{tpu_custom_call.1} parent=1 // loop_footer_branch
      %19 = sbr.rel target = $region3
    $region8: #{tpu_custom_call.1} parent=1 // loop_exit
      _
    %618 = vsyncpa [#allocation4], 1
    %s619 = scalar_lea.sflag [#allocation4], 1
    %620 = vsyncpa %s619, 1

</llo_original>
